<compile_context>
chip_gen: v5e
topology: v5e:2x2
jax: 0.10.0
libtpu: 0.0.40
codegen_flags: <defaults>
</compile_context>

<pallas_src>
import jax
import jax.numpy as jnp
from jax.experimental import pallas as pl
from jax.experimental.pallas import tpu as pltpu


def _policy_net_kernel(x_ref, w1t_ref, b1c_ref, w2t_ref, b2c_ref, w3d_ref, bd_ref, o_ref):
    # x_ref: (8, TB) f32, rows 0..3 = features, rows 4..7 = zero padding (batch on lanes).
    xb = x_ref[...].astype(jnp.bfloat16)                       # (8, TB) bf16

    # ---- layer 1 (4 -> 128): MXU, K zero-padded to 8, bf16 operands, f32 acc. ----
    h1 = jnp.dot(w1t_ref[...], xb,
                 preferred_element_type=jnp.float32) + b1c_ref[...]
    h1 = jnp.maximum(h1, 0.0)                                  # (128, TB) f32

    # ---- layer 2 (128 -> 128): MXU, bf16 operands, f32 acc. ----
    h2 = jnp.dot(w2t_ref[...], h1.astype(jnp.bfloat16),
                 preferred_element_type=jnp.float32) + b2c_ref[...]
    h2 = jnp.maximum(h2, 0.0)                                  # (128, TB) f32

    # ---- layer 3 (128 -> 2) + softmax, folded into the 2-class sigmoid identity. ----
    # w3d row 0 = w3[:, 1] - w3[:, 0] (rows 1..7 zero-padded for MXU alignment).
    d8 = jnp.dot(w3d_ref[...], h2.astype(jnp.bfloat16),
                 preferred_element_type=jnp.float32)           # (8, TB) f32
    d = d8[0:1, :] + bd_ref[0]                                 # (1, TB), lane-dense
    p1 = 1.0 / (1.0 + jnp.exp(-d))                             # softmax class 1
    o_ref[0:1, :] = 1.0 - p1                                   # softmax class 0
    o_ref[1:2, :] = p1


def _cdiv(a, b):
    return -(-a // b)


def _round_up(n, m):
    return _cdiv(n, m) * m


def _choose_tile(B, tb_max=4096):
    """Lane-multiple batch tile; >=2 grid steps when B allows (v7x megacore)."""
    lane = 128
    Bp = _round_up(max(B, 1), lane)
    if Bp <= lane:
        return lane
    n_steps = max(2, _cdiv(Bp, tb_max))
    return _round_up(_cdiv(Bp, n_steps), lane)


def policy_net_forward(x, params, tb=None):
    """x: (B, 4) float32 -> probs (B, 2) float32."""
    w1, b1, w2, b2, w3, b3 = params
    B = x.shape[0]

    if tb is None:
        tb = _choose_tile(B)
    tb = max(128, _round_up(tb, 128))           # batch tile lives on the lane axis
    Bp = _round_up(max(B, 1), tb)
    n_steps = Bp // tb

    # Lane-dense transposed input: (8, Bp); rows 0..3 = features, rows 4..7 = 0.
    xT = jnp.pad(x.T, ((0, 4), (0, Bp - B)))

    # One-time wrapper-side weight prep (cheap XLA ops).
    w1t = jnp.pad(w1.T, ((0, 0), (0, 4))).astype(jnp.bfloat16)     # (128, 8)  bf16
    b1c = b1.reshape(128, 1)                                        # (128, 1)  f32
    w2t = w2.T.astype(jnp.bfloat16)                                 # (128, 128) bf16
    b2c = b2.reshape(128, 1)                                        # (128, 1)  f32
    wd = (w3[:, 1] - w3[:, 0]).reshape(1, 128)                      # class-difference row
    w3d = jnp.pad(wd, ((0, 7), (0, 0))).astype(jnp.bfloat16)        # (8, 128)  bf16
    bd = (b3[0, 1] - b3[0, 0]).reshape(1)                           # (1,) f32, SMEM scalar

    const = lambda i: (0, 0)                    # weights/biases stay VMEM-resident
    out_t = pl.pallas_call(
        _policy_net_kernel,
        out_shape=jax.ShapeDtypeStruct((2, Bp), jnp.float32),
        grid=(n_steps,),
        in_specs=[
            pl.BlockSpec((8, tb), lambda i: (0, i)),                # x^T (pipelined)
            pl.BlockSpec((128, 8), const),                          # w1^T (zero-padded)
            pl.BlockSpec((128, 1), const),                          # b1 column
            pl.BlockSpec((128, 128), const),                        # w2^T
            pl.BlockSpec((128, 1), const),                          # b2 column
            pl.BlockSpec((8, 128), const),                          # w3 class-diff row
            pl.BlockSpec(memory_space=pltpu.MemorySpace.SMEM),      # b3 class-diff scalar
        ],
        out_specs=pl.BlockSpec((2, tb), lambda i: (0, i)),          # lane-dense output
        compiler_params=pltpu.CompilerParams(
            dimension_semantics=("parallel",),                      # megacore sharding
        ),
    )(xT, w1t, b1c, w2t, b2c, w3d, bd)

    return out_t[:, :B].T                                           # (B, 2)


def init_params(key):
    """PyTorch nn.Linear default init: U(-1/sqrt(fan_in), 1/sqrt(fan_in)).
    Weights stored as (in, out); biases as (1, out) rows."""
    keys = jax.random.split(key, 6)

    def linear(kw, kb, fan_in, fan_out):
        bound = 1.0 / jnp.sqrt(fan_in)
        w = jax.random.uniform(kw, (fan_in, fan_out), jnp.float32, -bound, bound)
        b = jax.random.uniform(kb, (1, fan_out), jnp.float32, -bound, bound)
        return w, b

    w1, b1 = linear(keys[0], keys[1], 4, 128)
    w2, b2 = linear(keys[2], keys[3], 128, 128)
    w3, b3 = linear(keys[4], keys[5], 128, 2)
    return (w1, b1, w2, b2, w3, b3)


def _reference_mixed(x, params):
    """Reference matching the kernel's numerics (bf16 MXU operands, f32 accumulation,
    2-class softmax via the sigmoid identity)."""
    w1, b1, w2, b2, w3, b3 = params
    h1 = jnp.dot(x.astype(jnp.bfloat16), w1.astype(jnp.bfloat16),
                 preferred_element_type=jnp.float32) + b1
    h1 = jnp.maximum(h1, 0.0)
    h2 = jnp.dot(h1.astype(jnp.bfloat16), w2.astype(jnp.bfloat16),
                 preferred_element_type=jnp.float32) + b2
    h2 = jnp.maximum(h2, 0.0)
    wd = (w3[:, 1] - w3[:, 0]).astype(jnp.bfloat16)
    bd = b3[0, 1] - b3[0, 0]
    d = jnp.dot(h2.astype(jnp.bfloat16), wd, preferred_element_type=jnp.float32) + bd
    p1 = 1.0 / (1.0 + jnp.exp(-d))
    return jnp.stack([1.0 - p1, p1], axis=-1)


def _reference_f32(x, params):
    """Full float32 reference (what the PyTorch module computes)."""
    w1, b1, w2, b2, w3, b3 = params
    hi = jax.lax.Precision.HIGHEST
    h1 = jnp.maximum(jnp.dot(x, w1, precision=hi) + b1, 0.0)
    h2 = jnp.maximum(jnp.dot(h1, w2, precision=hi) + b2, 0.0)
    logits = jnp.dot(h2, w3, precision=hi) + b3
    return jax.nn.softmax(logits, axis=-1)


if __name__ == "__main__":
    key = jax.random.PRNGKey(0)
    pkey, xkey = jax.random.split(key)
    params = init_params(pkey)

    # Small demo batch (single RL rollout chunk).
    x = jax.random.normal(xkey, (8, 4), jnp.float32)
    probs = jax.block_until_ready(policy_net_forward(x, params))
    assert probs.shape == (8, 2)
    assert jnp.allclose(jnp.sum(probs, axis=-1), 1.0, atol=1e-5)
    assert jnp.allclose(probs, _reference_mixed(x, params), atol=2e-3)
    assert jnp.allclose(probs, _reference_f32(x, params), atol=5e-2)   # bf16 MXU tolerance

    # Default tiling: multi-step grid (>=2 parallel tiles) + batch padding.
    x2 = jax.random.normal(jax.random.PRNGKey(1), (1000, 4), jnp.float32)
    probs2 = jax.block_until_ready(policy_net_forward(x2, params))
    assert probs2.shape == (1000, 2)
    assert jnp.allclose(jnp.sum(probs2, axis=-1), 1.0, atol=1e-5)
    assert jnp.allclose(probs2, _reference_mixed(x2, params), atol=2e-3)
    assert jnp.allclose(probs2, _reference_f32(x2, params), atol=5e-2)

    # Explicit small tile, batch not a multiple of the tile.
    x3 = jax.random.normal(jax.random.PRNGKey(2), (200, 4), jnp.float32)
    probs3 = jax.block_until_ready(policy_net_forward(x3, params, tb=128))
    assert probs3.shape == (200, 2)
    assert jnp.allclose(jnp.sum(probs3, axis=-1), 1.0, atol=1e-5)
    assert jnp.allclose(probs3, _reference_mixed(x3, params), atol=2e-3)

    print("KERNEL_OK")
</pallas_src>

<mosaic_0001>
module attributes {stable_mosaic.version = 11 : i64} {
  func.func @_policy_net_kernel(%arg0: i32, %arg1: memref<8x128xf32, #tpu.memory_space<vmem>>, %arg2: memref<128x8xbf16, #tpu.memory_space<vmem>>, %arg3: memref<128x1xf32, #tpu.memory_space<vmem>>, %arg4: memref<128x128xbf16, #tpu.memory_space<vmem>>, %arg5: memref<128x1xf32, #tpu.memory_space<vmem>>, %arg6: memref<8x128xbf16, #tpu.memory_space<vmem>>, %arg7: memref<1xf32, #tpu.memory_space<smem>>, %arg8: memref<2x128xf32, #tpu.memory_space<vmem>>) attributes {dimension_semantics = [#tpu.dimension_semantics<parallel>], iteration_bounds = array<i64: 1>, scalar_prefetch = 0 : i64, scratch_operands = 0 : i64, tpu.core_type = #tpu.core_type<tc>, window_params = [{transform_indices = @transform_0, window_bounds = array<i64: 8, 128>}, {pipeline_mode = #tpu.pipeline_mode<synchronous>, transform_indices = @transform_1, window_bounds = array<i64: 128, 8>}, {pipeline_mode = #tpu.pipeline_mode<synchronous>, transform_indices = @transform_2, window_bounds = array<i64: 128, 1>}, {pipeline_mode = #tpu.pipeline_mode<synchronous>, transform_indices = @transform_3, window_bounds = array<i64: 128, 128>}, {pipeline_mode = #tpu.pipeline_mode<synchronous>, transform_indices = @transform_4, window_bounds = array<i64: 128, 1>}, {pipeline_mode = #tpu.pipeline_mode<synchronous>, transform_indices = @transform_5, window_bounds = array<i64: 8, 128>}, {transform_indices = @transform_6, window_bounds = array<i64: 1>}, {transform_indices = @transform_7, window_bounds = array<i64: 2, 128>}]} {
    %c0 = arith.constant 0 : index
    %c0_0 = arith.constant 0 : index
    %0 = vector.load %arg1[%c0, %c0_0] : memref<8x128xf32, #tpu.memory_space<vmem>>, vector<8x128xf32>
    %1 = arith.truncf %0 : vector<8x128xf32> to vector<8x128xbf16>
    %c0_1 = arith.constant 0 : index
    %c0_2 = arith.constant 0 : index
    %2 = vector.load %arg2[%c0_1, %c0_2] : memref<128x8xbf16, #tpu.memory_space<vmem>>, vector<128x8xbf16>
    %cst = arith.constant dense<0.000000e+00> : vector<128x128xf32>
    %3 = tpu.matmul %2, %1, %cst {dimension_numbers = #tpu.dot_dimension_numbers<[1], [0], [0], [1], [0, 0, 1, 1], [], []>} : vector<128x8xbf16>, vector<8x128xbf16>, vector<128x128xf32> -> vector<128x128xf32>
    %c0_3 = arith.constant 0 : index
    %c0_4 = arith.constant 0 : index
    %4 = vector.load %arg3[%c0_3, %c0_4] : memref<128x1xf32, #tpu.memory_space<vmem>>, vector<128x1xf32>
    %5 = vector.broadcast %4 : vector<128x1xf32> to vector<128x128xf32>
    %6 = arith.addf %3, %5 : vector<128x128xf32>
    %cst_5 = arith.constant 0.000000e+00 : f32
    %7 = vector.broadcast %cst_5 : f32 to vector<128x128xf32>
    %8 = arith.maximumf %6, %7 : vector<128x128xf32>
    %c0_6 = arith.constant 0 : index
    %c0_7 = arith.constant 0 : index
    %9 = vector.load %arg4[%c0_6, %c0_7] : memref<128x128xbf16, #tpu.memory_space<vmem>>, vector<128x128xbf16>
    %10 = arith.truncf %8 : vector<128x128xf32> to vector<128x128xbf16>
    %cst_8 = arith.constant dense<0.000000e+00> : vector<128x128xf32>
    %11 = tpu.matmul %9, %10, %cst_8 {dimension_numbers = #tpu.dot_dimension_numbers<[1], [0], [0], [1], [0, 0, 1, 1], [], []>} : vector<128x128xbf16>, vector<128x128xbf16>, vector<128x128xf32> -> vector<128x128xf32>
    %c0_9 = arith.constant 0 : index
    %c0_10 = arith.constant 0 : index
    %12 = vector.load %arg5[%c0_9, %c0_10] : memref<128x1xf32, #tpu.memory_space<vmem>>, vector<128x1xf32>
    %13 = vector.broadcast %12 : vector<128x1xf32> to vector<128x128xf32>
    %14 = arith.addf %11, %13 : vector<128x128xf32>
    %cst_11 = arith.constant 0.000000e+00 : f32
    %15 = vector.broadcast %cst_11 : f32 to vector<128x128xf32>
    %16 = arith.maximumf %14, %15 : vector<128x128xf32>
    %c0_12 = arith.constant 0 : index
    %c0_13 = arith.constant 0 : index
    %17 = vector.load %arg6[%c0_12, %c0_13] : memref<8x128xbf16, #tpu.memory_space<vmem>>, vector<8x128xbf16>
    %18 = arith.truncf %16 : vector<128x128xf32> to vector<128x128xbf16>
    %cst_14 = arith.constant dense<0.000000e+00> : vector<8x128xf32>
    %19 = tpu.matmul %17, %18, %cst_14 {dimension_numbers = #tpu.dot_dimension_numbers<[1], [0], [0], [1], [0, 0, 1, 1], [], []>} : vector<8x128xbf16>, vector<128x128xbf16>, vector<8x128xf32> -> vector<8x128xf32>
    %20 = vector.extract_strided_slice %19 {offsets = [0, 0], sizes = [1, 128], strides = [1, 1]} : vector<8x128xf32> to vector<1x128xf32>
    %c0_15 = arith.constant 0 : index
    %21 = memref.load %arg7[%c0_15] : memref<1xf32, #tpu.memory_space<smem>>
    %22 = vector.broadcast %21 : f32 to vector<1x128xf32>
    %23 = arith.addf %20, %22 : vector<1x128xf32>
    %cst_16 = arith.constant 0.000000e+00 : f32
    %24 = vector.broadcast %cst_16 : f32 to vector<1x128xf32>
    %25 = arith.subf %24, %23 : vector<1x128xf32>
    %26 = math.exp %25 : vector<1x128xf32>
    %cst_17 = arith.constant 1.000000e+00 : f32
    %27 = vector.broadcast %cst_17 : f32 to vector<1x128xf32>
    %28 = arith.addf %27, %26 : vector<1x128xf32>
    %cst_18 = arith.constant 1.000000e+00 : f32
    %29 = vector.broadcast %cst_18 : f32 to vector<1x128xf32>
    %30 = arith.divf %29, %28 : vector<1x128xf32>
    %cst_19 = arith.constant 1.000000e+00 : f32
    %31 = vector.broadcast %cst_19 : f32 to vector<1x128xf32>
    %32 = arith.subf %31, %30 : vector<1x128xf32>
    %c0_20 = arith.constant 0 : index
    %c0_21 = arith.constant 0 : index
    %33 = vector.load %arg8[%c0_20, %c0_21] : memref<2x128xf32, #tpu.memory_space<vmem>>, vector<1x128xf32>
    tpu.vector_store %arg8[%c0_20, %c0_21], %32 {strides = array<i32>} : memref<2x128xf32, #tpu.memory_space<vmem>>, vector<1x128xf32>,
    %c1 = arith.constant 1 : index
    %c0_22 = arith.constant 0 : index
    %34 = vector.load %arg8[%c1, %c0_22] : memref<2x128xf32, #tpu.memory_space<vmem>>, vector<1x128xf32>
    tpu.vector_store %arg8[%c1, %c0_22], %30 {strides = array<i32>} : memref<2x128xf32, #tpu.memory_space<vmem>>, vector<1x128xf32>,
    return
  }
  func.func @transform_0(%arg0: i32) -> (i32, i32) {
    %c0_i32 = arith.constant 0 : i32
    %c0_i32_0 = arith.constant 0 : i32
    return %c0_i32, %arg0 : i32, i32
  }
  func.func @transform_1(%arg0: i32) -> (i32, i32) {
    %c0_i32 = arith.constant 0 : i32
    %c0_i32_0 = arith.constant 0 : i32
    %c0_i32_1 = arith.constant 0 : i32
    return %c0_i32, %c0_i32_0 : i32, i32
  }
  func.func @transform_2(%arg0: i32) -> (i32, i32) {
    %c0_i32 = arith.constant 0 : i32
    %c0_i32_0 = arith.constant 0 : i32
    %c0_i32_1 = arith.constant 0 : i32
    return %c0_i32, %c0_i32_0 : i32, i32
  }
  func.func @transform_3(%arg0: i32) -> (i32, i32) {
    %c0_i32 = arith.constant 0 : i32
    %c0_i32_0 = arith.constant 0 : i32
    %c0_i32_1 = arith.constant 0 : i32
    return %c0_i32, %c0_i32_0 : i32, i32
  }
  func.func @transform_4(%arg0: i32) -> (i32, i32) {
    %c0_i32 = arith.constant 0 : i32
    %c0_i32_0 = arith.constant 0 : i32
    %c0_i32_1 = arith.constant 0 : i32
    return %c0_i32, %c0_i32_0 : i32, i32
  }
  func.func @transform_5(%arg0: i32) -> (i32, i32) {
    %c0_i32 = arith.constant 0 : i32
    %c0_i32_0 = arith.constant 0 : i32
    %c0_i32_1 = arith.constant 0 : i32
    return %c0_i32, %c0_i32_0 : i32, i32
  }
  func.func @transform_6(%arg0: i32) -> i32 {
    %c0_i32 = arith.constant 0 : i32
    %c0_i32_0 = arith.constant 0 : i32
    return %c0_i32 : i32
  }
  func.func @transform_7(%arg0: i32) -> (i32, i32) {
    %c0_i32 = arith.constant 0 : i32
    %c0_i32_0 = arith.constant 0 : i32
    return %c0_i32, %arg0 : i32, i32
  }
}

</mosaic_0001>

<llo_original>
// kernel: tpu_custom_call.1
$region0: #{tpu_custom_call.1}
  #allocation0 [shape = 'u32[]', space=smem, size = 0x4, offset = 0x4, fixed_abs, tag = 'smem constant byte address 0x4 - core index']
  #allocation1 [shape = 'u32[72,128]{1,0:T(1,128)}', space=vmem, size = 0x9000, scoped, tag = 'internal scratch']
  #allocation2 [shape = 'f32[1]{0:T(128)S(6)}', space=smem, size = 0x200, scoped, tag = 'scoped memory for tpu_custom_call.1']
  %s0 = inlined_call_operand.vmem [shape: f32[8,128], index: 0, kind: input, shape index: {}]
  %s1 = inlined_call_operand.vmem [shape: bf16[128,8], index: 1, kind: input, shape index: {}]
  %s2 = inlined_call_operand.vmem [shape: f32[128,1], index: 2, kind: input, shape index: {}]
  %s3 = inlined_call_operand.vmem [shape: bf16[128,128], index: 3, kind: input, shape index: {}]
  %s4 = inlined_call_operand.vmem [shape: f32[128,1], index: 4, kind: input, shape index: {}]
  %s5 = inlined_call_operand.vmem [shape: bf16[8,128], index: 5, kind: input, shape index: {}]
  %s6 = inlined_call_operand.<no memory space> [shape: f32[1], index: 6, kind: input, shape index: {}]
  %s7 = inlined_call_operand.hbm [shape: f32[2,128], index: 7, kind: output, shape index: {}]
  %s8 = sld [smem:[#allocation0]]
  $region38: #{tpu_custom_call.1} parent=0
    _
  %s10 = ssub.s32 1, %s8
  %s11 = scalar_select 0, %s10, %s8
  %12 = sst [smem:[#allocation2]] %s6
  $region1: #{tpu_custom_call.1} parent=0
    #allocation3 [shape = 'u8[1024]{0}', space=vmem, size = 0x400, scoped, tag = 'output window, operand 0, single buffered']
    #allocation4 [shape = 's32[1]{0}', space=sflag, size = 0x4, scoped, tag = 'scoped memory for tpu_custom_call.1']
    %13 = vsyncpa [#allocation4], 0
    // Predicated region
    $region2: #{tpu_custom_call.1} parent=1 // pred_check
      _
    $region3: #{tpu_custom_call.1} parent=1 // pred_check_branch
      %15 = sbr.rel (0) target = $region5
    $region4: #{tpu_custom_call.1} parent=1 // pred_region
      _
    $region5: #{tpu_custom_call.1} parent=1 // pred_fallthru
      _
    // Predicated region
    $region6: #{tpu_custom_call.1} parent=1 // pred_check
      _
    $region7: #{tpu_custom_call.1} parent=1 // pred_check_branch
      %17 = sbr.rel (0) target = $region9
    $region8: #{tpu_custom_call.1} parent=1 // pred_region
      _
    $region9: #{tpu_custom_call.1} parent=1 // pred_fallthru
      _
    // Predicated region
    $region10: #{tpu_custom_call.1} parent=1 // pred_check
      _
    $region11: #{tpu_custom_call.1} parent=1 // pred_check_branch
      %19 = sbr.rel (0) target = $region13
    $region12: #{tpu_custom_call.1} parent=1 // pred_region
      _
    $region13: #{tpu_custom_call.1} parent=1 // pred_fallthru
      _
    // Predicated region
    $region14: #{tpu_custom_call.1} parent=1 // pred_check
      _
    $region15: #{tpu_custom_call.1} parent=1 // pred_check_branch
      %21 = sbr.rel (0) target = $region17
    $region16: #{tpu_custom_call.1} parent=1 // pred_region
      _
    $region17: #{tpu_custom_call.1} parent=1 // pred_fallthru
      _
    // Predicated region
    $region18: #{tpu_custom_call.1} parent=1 // pred_check
      _
    $region19: #{tpu_custom_call.1} parent=1 // pred_check_branch
      %23 = sbr.rel (0) target = $region21
    $region20: #{tpu_custom_call.1} parent=1 // pred_region
      _
    $region21: #{tpu_custom_call.1} parent=1 // pred_fallthru
      _
    // Predicated region
    $region22: #{tpu_custom_call.1} parent=1 // pred_check
      _
    $region23: #{tpu_custom_call.1} parent=1 // pred_check_branch
      %25 = sbr.rel (0) target = $region25
    $region24: #{tpu_custom_call.1} parent=1 // pred_region
      _
    $region25: #{tpu_custom_call.1} parent=1 // pred_fallthru
      _
    // Predicated region
    $region26: #{tpu_custom_call.1} parent=1 // pred_check
      _
    $region27: #{tpu_custom_call.1} parent=1 // pred_check_branch
      %27 = sbr.rel (0) target = $region29
    $region28: #{tpu_custom_call.1} parent=1 // pred_region
      _
    $region29: #{tpu_custom_call.1} parent=1 // pred_fallthru
      _
    %v29 = vld [vmem:[%s0] sm:$0xff]
    %v30 = vpack.c.bf16 %v29, %v29
    %v31 = vld [vmem:[%s1] sm:$0xf]
    %v32 = vld [vmem:[%s1 + $0x4] sm:$0xf]
    %v33 = vld [vmem:[%s1 + $0x8] sm:$0xf]
    %v34 = vld [vmem:[%s1 + $0xc] sm:$0xf]
    %v35 = vld [vmem:[%s1 + $0x10] sm:$0xf]
    %v36 = vld [vmem:[%s1 + $0x14] sm:$0xf]
    %v37 = vld [vmem:[%s1 + $0x18] sm:$0xf]
    %v38 = vld [vmem:[%s1 + $0x1c] sm:$0xf]
    %v39 = vld [vmem:[%s1 + $0x20] sm:$0xf]
    %v40 = vld [vmem:[%s1 + $0x24] sm:$0xf]
    %v41 = vld [vmem:[%s1 + $0x28] sm:$0xf]
    %v42 = vld [vmem:[%s1 + $0x2c] sm:$0xf]
    %v43 = vld [vmem:[%s1 + $0x30] sm:$0xf]
    %v44 = vld [vmem:[%s1 + $0x34] sm:$0xf]
    %v45 = vld [vmem:[%s1 + $0x38] sm:$0xf]
    %v46 = vld [vmem:[%s1 + $0x3c] sm:$0xf]
    %v47 = vld [vmem:[%s2] sm:$0xff]
    %v48 = vld [vmem:[%s2 + $0x8] sm:$0xff]
    %v49 = vld [vmem:[%s2 + $0x10] sm:$0xff]
    %v50 = vld [vmem:[%s2 + $0x18] sm:$0xff]
    %v51 = vld [vmem:[%s2 + $0x20] sm:$0xff]
    %v52 = vld [vmem:[%s2 + $0x28] sm:$0xff]
    %v53 = vld [vmem:[%s2 + $0x30] sm:$0xff]
    %v54 = vld [vmem:[%s2 + $0x38] sm:$0xff]
    %v55 = vld [vmem:[%s2 + $0x40] sm:$0xff]
    %v56 = vld [vmem:[%s2 + $0x48] sm:$0xff]
    %v57 = vld [vmem:[%s2 + $0x50] sm:$0xff]
    %v58 = vld [vmem:[%s2 + $0x58] sm:$0xff]
    %v59 = vld [vmem:[%s2 + $0x60] sm:$0xff]
    %v60 = vld [vmem:[%s2 + $0x68] sm:$0xff]
    %v61 = vld [vmem:[%s2 + $0x70] sm:$0xff]
    %v62 = vld [vmem:[%s2 + $0x78] sm:$0xff]
    %64 = vset.pattern.permute.xlu0 0
    %65 = vperm.xlu0 %64, %v47
    %v66 = vpop.permute.xlu0 %65
    %69 = vset.pattern.permute.xlu0 0
    %70 = vperm.xlu0 %69, %v48
    %v71 = vpop.permute.xlu0 %70
    %74 = vset.pattern.permute.xlu0 0
    %75 = vperm.xlu0 %74, %v49
    %v76 = vpop.permute.xlu0 %75
    %79 = vset.pattern.permute.xlu0 0
    %80 = vperm.xlu0 %79, %v50
    %v81 = vpop.permute.xlu0 %80
    %84 = vset.pattern.permute.xlu0 0
    %85 = vperm.xlu0 %84, %v51
    %v86 = vpop.permute.xlu0 %85
    %89 = vset.pattern.permute.xlu0 0
    %90 = vperm.xlu0 %89, %v52
    %v91 = vpop.permute.xlu0 %90
    %94 = vset.pattern.permute.xlu0 0
    %95 = vperm.xlu0 %94, %v53
    %v96 = vpop.permute.xlu0 %95
    %99 = vset.pattern.permute.xlu0 0
    %100 = vperm.xlu0 %99, %v54
    %v101 = vpop.permute.xlu0 %100
    %104 = vset.pattern.permute.xlu0 0
    %105 = vperm.xlu0 %104, %v55
    %v106 = vpop.permute.xlu0 %105
    %109 = vset.pattern.permute.xlu0 0
    %110 = vperm.xlu0 %109, %v56
    %v111 = vpop.permute.xlu0 %110
    %114 = vset.pattern.permute.xlu0 0
    %115 = vperm.xlu0 %114, %v57
    %v116 = vpop.permute.xlu0 %115
    %119 = vset.pattern.permute.xlu0 0
    %120 = vperm.xlu0 %119, %v58
    %v121 = vpop.permute.xlu0 %120
    %124 = vset.pattern.permute.xlu0 0
    %125 = vperm.xlu0 %124, %v59
    %v126 = vpop.permute.xlu0 %125
    %129 = vset.pattern.permute.xlu0 0
    %130 = vperm.xlu0 %129, %v60
    %v131 = vpop.permute.xlu0 %130
    %134 = vset.pattern.permute.xlu0 0
    %135 = vperm.xlu0 %134, %v61
    %v136 = vpop.permute.xlu0 %135
    %139 = vset.pattern.permute.xlu0 0
    %140 = vperm.xlu0 %139, %v62
    %v141 = vpop.permute.xlu0 %140
    %v159 = vunpack.c.l.b16 %v31
    %v160 = vunpack.c.l.b16 %v32
    %v161 = vunpack.c.l.b16 %v33
    %v162 = vunpack.c.l.b16 %v34
    %v163 = vunpack.c.l.b16 %v35
    %v164 = vunpack.c.l.b16 %v36
    %v165 = vunpack.c.l.b16 %v37
    %v166 = vunpack.c.l.b16 %v38
    %v167 = vunpack.c.l.b16 %v39
    %v168 = vunpack.c.l.b16 %v40
    %v169 = vunpack.c.l.b16 %v41
    %v170 = vunpack.c.l.b16 %v42
    %v171 = vunpack.c.l.b16 %v43
    %v172 = vunpack.c.l.b16 %v44
    %v173 = vunpack.c.l.b16 %v45
    %v174 = vunpack.c.l.b16 %v46
    %v175 = vpack.c.b16 %v160, %v159
    %v176 = vpack.c.b16 %v162, %v161
    %v177 = vpack.c.b16 %v164, %v163
    %v178 = vpack.c.b16 %v166, %v165
    %v179 = vpack.c.b16 %v168, %v167
    %v180 = vpack.c.b16 %v170, %v169
    %v181 = vpack.c.b16 %v172, %v171
    %v182 = vpack.c.b16 %v174, %v173
    %vm183 = vcmask 64512
    %v185 = vsel %vm183, %v175, 0
    %v188 = vsel %vm183, %v176, 0
    %v191 = vsel %vm183, %v177, 0
    %v194 = vsel %vm183, %v178, 0
    %v197 = vsel %vm183, %v179, 0
    %v200 = vsel %vm183, %v180, 0
    %v203 = vsel %vm183, %v181, 0
    %v206 = vsel %vm183, %v182, 0
    %vm208 = vcmask 1043456
    %v210 = vsel %vm208, %v30, 0
    %212 = vmatpush.bf16.msra.mxu0 0
    %213 = vmatpush.bf16.msra.mxu0 0
    %214 = vmatpush.bf16.msra.mxu0 0
    %215 = vmatpush.bf16.msra.mxu0 0
    %216 = vmatpush.bf16.msra.mxu0 0
    %217 = vmatpush.bf16.msra.mxu0 0
    %218 = vmatpush.bf16.msra.mxu0 0
    %219 = vmatpush.bf16.msra.mxu0 %v210
    %220 = vmatmul.bf16.gmra.mxu0 %v185
    %v221 = vpop.f32.mrf.mxu0
    %v222 = vadd.f32 %v66, %v221
    %v223 = vpop.f32.mrf.mxu0
    %v224 = vadd.f32 %v71, %v223
    %225 = vmatmul.bf16.gmra.mxu0 %v188
    %v226 = vpop.f32.mrf.mxu0
    %v227 = vadd.f32 %v76, %v226
    %v228 = vpop.f32.mrf.mxu0
    %v229 = vadd.f32 %v81, %v228
    %230 = vmatmul.bf16.gmra.mxu0 %v191
    %v231 = vpop.f32.mrf.mxu0
    %v232 = vadd.f32 %v86, %v231
    %v233 = vpop.f32.mrf.mxu0
    %v234 = vadd.f32 %v91, %v233
    %235 = vmatmul.bf16.gmra.mxu0 %v194
    %v236 = vpop.f32.mrf.mxu0
    %v237 = vadd.f32 %v96, %v236
    %v238 = vpop.f32.mrf.mxu0
    %v239 = vadd.f32 %v101, %v238
    %240 = vmatmul.bf16.gmra.mxu0 %v197
    %v241 = vpop.f32.mrf.mxu0
    %v242 = vadd.f32 %v106, %v241
    %v243 = vpop.f32.mrf.mxu0
    %v244 = vadd.f32 %v111, %v243
    %245 = vmatmul.bf16.gmra.mxu0 %v200
    %v246 = vpop.f32.mrf.mxu0
    %v247 = vadd.f32 %v116, %v246
    %v248 = vpop.f32.mrf.mxu0
    %v249 = vadd.f32 %v121, %v248
    %250 = vmatmul.bf16.gmra.mxu0 %v203
    %v251 = vpop.f32.mrf.mxu0
    %v252 = vadd.f32 %v126, %v251
    %v253 = vpop.f32.mrf.mxu0
    %v254 = vadd.f32 %v131, %v253
    %255 = vmatmul.bf16.gmra.mxu0 %v206
    %v256 = vpop.f32.mrf.mxu0
    %v257 = vadd.f32 %v136, %v256
    %v258 = vpop.f32.mrf.mxu0
    %v259 = vadd.f32 %v141, %v258
    %260 = vdwg.mxu0
    %v261 = vmax.f32 %v222, 0.0
    %v262 = vmax.f32 %v224, 0.0
    %v263 = vmax.f32 %v227, 0.0
    %v264 = vmax.f32 %v229, 0.0
    %v265 = vmax.f32 %v232, 0.0
    %v266 = vmax.f32 %v234, 0.0
    %v267 = vmax.f32 %v237, 0.0
    %v268 = vmax.f32 %v239, 0.0
    %v269 = vmax.f32 %v242, 0.0
    %v270 = vmax.f32 %v244, 0.0
    %v271 = vmax.f32 %v247, 0.0
    %v272 = vmax.f32 %v249, 0.0
    %v273 = vmax.f32 %v252, 0.0
    %v274 = vmax.f32 %v254, 0.0
    %v275 = vmax.f32 %v257, 0.0
    %v276 = vmax.f32 %v259, 0.0
    %v277 = vld [vmem:[%s3] sm:$0xf]
    %v278 = vld [vmem:[%s3 + $0x4] sm:$0xf]
    %v279 = vld [vmem:[%s3 + $0x8] sm:$0xf]
    %v280 = vld [vmem:[%s3 + $0xc] sm:$0xf]
    %v281 = vld [vmem:[%s3 + $0x10] sm:$0xf]
    %v282 = vld [vmem:[%s3 + $0x14] sm:$0xf]
    %v283 = vld [vmem:[%s3 + $0x18] sm:$0xf]
    %v284 = vld [vmem:[%s3 + $0x1c] sm:$0xf]
    %v285 = vld [vmem:[%s3 + $0x20] sm:$0xf]
    %v286 = vld [vmem:[%s3 + $0x24] sm:$0xf]
    %v287 = vld [vmem:[%s3 + $0x28] sm:$0xf]
    %v288 = vld [vmem:[%s3 + $0x2c] sm:$0xf]
    %v289 = vld [vmem:[%s3 + $0x30] sm:$0xf]
    %v290 = vld [vmem:[%s3 + $0x34] sm:$0xf]
    %v291 = vld [vmem:[%s3 + $0x38] sm:$0xf]
    %v292 = vld [vmem:[%s3 + $0x3c] sm:$0xf]
    %v293 = vpack.c.bf16 %v262, %v261
    %v294 = vpack.c.bf16 %v264, %v263
    %v295 = vpack.c.bf16 %v266, %v265
    %v296 = vpack.c.bf16 %v268, %v267
    %v297 = vpack.c.bf16 %v270, %v269
    %v298 = vpack.c.bf16 %v272, %v271
    %v299 = vpack.c.bf16 %v274, %v273
    %v300 = vpack.c.bf16 %v276, %v275
    %v301 = vld [vmem:[%s4] sm:$0xff]
    %v302 = vld [vmem:[%s4 + $0x8] sm:$0xff]
    %v303 = vld [vmem:[%s4 + $0x10] sm:$0xff]
    %v304 = vld [vmem:[%s4 + $0x18] sm:$0xff]
    %v305 = vld [vmem:[%s4 + $0x20] sm:$0xff]
    %v306 = vld [vmem:[%s4 + $0x28] sm:$0xff]
    %v307 = vld [vmem:[%s4 + $0x30] sm:$0xff]
    %v308 = vld [vmem:[%s4 + $0x38] sm:$0xff]
    %v309 = vld [vmem:[%s4 + $0x40] sm:$0xff]
    %v310 = vld [vmem:[%s4 + $0x48] sm:$0xff]
    %v311 = vld [vmem:[%s4 + $0x50] sm:$0xff]
    %v312 = vld [vmem:[%s4 + $0x58] sm:$0xff]
    %v313 = vld [vmem:[%s4 + $0x60] sm:$0xff]
    %v314 = vld [vmem:[%s4 + $0x68] sm:$0xff]
    %v315 = vld [vmem:[%s4 + $0x70] sm:$0xff]
    %v316 = vld [vmem:[%s4 + $0x78] sm:$0xff]
    %318 = vset.pattern.permute.xlu0 0
    %319 = vperm.xlu0 %318, %v301
    %v320 = vpop.permute.xlu0 %319
    %323 = vset.pattern.permute.xlu0 0
    %324 = vperm.xlu0 %323, %v302
    %v325 = vpop.permute.xlu0 %324
    %328 = vset.pattern.permute.xlu0 0
    %329 = vperm.xlu0 %328, %v303
    %v330 = vpop.permute.xlu0 %329
    %333 = vset.pattern.permute.xlu0 0
    %334 = vperm.xlu0 %333, %v304
    %v335 = vpop.permute.xlu0 %334
    %338 = vset.pattern.permute.xlu0 0
    %339 = vperm.xlu0 %338, %v305
    %v340 = vpop.permute.xlu0 %339
    %343 = vset.pattern.permute.xlu0 0
    %344 = vperm.xlu0 %343, %v306
    %v345 = vpop.permute.xlu0 %344
    %348 = vset.pattern.permute.xlu0 0
    %349 = vperm.xlu0 %348, %v307
    %v350 = vpop.permute.xlu0 %349
    %353 = vset.pattern.permute.xlu0 0
    %354 = vperm.xlu0 %353, %v308
    %v355 = vpop.permute.xlu0 %354
    %358 = vset.pattern.permute.xlu0 0
    %359 = vperm.xlu0 %358, %v309
    %v360 = vpop.permute.xlu0 %359
    %363 = vset.pattern.permute.xlu0 0
    %364 = vperm.xlu0 %363, %v310
    %v365 = vpop.permute.xlu0 %364
    %368 = vset.pattern.permute.xlu0 0
    %369 = vperm.xlu0 %368, %v311
    %v370 = vpop.permute.xlu0 %369
    %373 = vset.pattern.permute.xlu0 0
    %374 = vperm.xlu0 %373, %v312
    %v375 = vpop.permute.xlu0 %374
    %378 = vset.pattern.permute.xlu0 0
    %379 = vperm.xlu0 %378, %v313
    %v380 = vpop.permute.xlu0 %379
    %383 = vset.pattern.permute.xlu0 0
    %384 = vperm.xlu0 %383, %v314
    %v385 = vpop.permute.xlu0 %384
    %388 = vset.pattern.permute.xlu0 0
    %389 = vperm.xlu0 %388, %v315
    %v390 = vpop.permute.xlu0 %389
    %393 = vset.pattern.permute.xlu0 0
    %394 = vperm.xlu0 %393, %v316
    %v395 = vpop.permute.xlu0 %394
    %v413 = vunpack.c.l.b16 %v277
    %v414 = vunpack.c.l.b16 %v278
    %v415 = vunpack.c.l.b16 %v279
    %v416 = vunpack.c.l.b16 %v280
    %v417 = vunpack.c.l.b16 %v281
    %v418 = vunpack.c.l.b16 %v282
    %v419 = vunpack.c.l.b16 %v283
    %v420 = vunpack.c.l.b16 %v284
    %v421 = vunpack.c.l.b16 %v285
    %v422 = vunpack.c.l.b16 %v286
    %v423 = vunpack.c.l.b16 %v287
    %v424 = vunpack.c.l.b16 %v288
    %v425 = vunpack.c.l.b16 %v289
    %v426 = vunpack.c.l.b16 %v290
    %v427 = vunpack.c.l.b16 %v291
    %v428 = vunpack.c.l.b16 %v292
    %v429 = vpack.c.b16 %v414, %v413
    %v430 = vpack.c.b16 %v416, %v415
    %v431 = vpack.c.b16 %v418, %v417
    %v432 = vpack.c.b16 %v420, %v419
    %v433 = vpack.c.b16 %v422, %v421
    %v434 = vpack.c.b16 %v424, %v423
    %v435 = vpack.c.b16 %v426, %v425
    %v436 = vpack.c.b16 %v428, %v427
    %445 = vmatpush.bf16.msra.mxu0 %v300
    %446 = vmatpush.bf16.msra.mxu0 %v299
    %447 = vmatpush.bf16.msra.mxu0 %v298
    %448 = vmatpush.bf16.msra.mxu0 %v297
    %449 = vmatpush.bf16.msra.mxu0 %v296
    %450 = vmatpush.bf16.msra.mxu0 %v295
    %451 = vmatpush.bf16.msra.mxu0 %v294
    %452 = vmatpush.bf16.msra.mxu0 %v293
    %453 = vmatmul.bf16.gmra.mxu0 %v429
    %v454 = vpop.f32.mrf.mxu0
    %v455 = vadd.f32 %v320, %v454
    %v456 = vpop.f32.mrf.mxu0
    %v457 = vadd.f32 %v325, %v456
    %458 = vmatmul.bf16.gmra.mxu0 %v430
    %v459 = vpop.f32.mrf.mxu0
    %v460 = vadd.f32 %v330, %v459
    %v461 = vpop.f32.mrf.mxu0
    %v462 = vadd.f32 %v335, %v461
    %463 = vmatmul.bf16.gmra.mxu0 %v431
    %v464 = vpop.f32.mrf.mxu0
    %v465 = vadd.f32 %v340, %v464
    %v466 = vpop.f32.mrf.mxu0
    %v467 = vadd.f32 %v345, %v466
    %468 = vmatmul.bf16.gmra.mxu0 %v432
    %v469 = vpop.f32.mrf.mxu0
    %v470 = vadd.f32 %v350, %v469
    %v471 = vpop.f32.mrf.mxu0
    %v472 = vadd.f32 %v355, %v471
    %473 = vmatmul.bf16.gmra.mxu0 %v433
    %v474 = vpop.f32.mrf.mxu0
    %v475 = vadd.f32 %v360, %v474
    %v476 = vpop.f32.mrf.mxu0
    %v477 = vadd.f32 %v365, %v476
    %478 = vmatmul.bf16.gmra.mxu0 %v434
    %v479 = vpop.f32.mrf.mxu0
    %v480 = vadd.f32 %v370, %v479
    %v481 = vpop.f32.mrf.mxu0
    %v482 = vadd.f32 %v375, %v481
    %483 = vmatmul.bf16.gmra.mxu0 %v435
    %v484 = vpop.f32.mrf.mxu0
    %v485 = vadd.f32 %v380, %v484
    %v486 = vpop.f32.mrf.mxu0
    %v487 = vadd.f32 %v385, %v486
    %488 = vmatmul.bf16.gmra.mxu0 %v436
    %v489 = vpop.f32.mrf.mxu0
    %v490 = vadd.f32 %v390, %v489
    %v491 = vpop.f32.mrf.mxu0
    %v492 = vadd.f32 %v395, %v491
    %493 = vdwg.mxu0
    %v494 = vmax.f32 %v455, 0.0
    %v495 = vmax.f32 %v457, 0.0
    %v496 = vmax.f32 %v460, 0.0
    %v497 = vmax.f32 %v462, 0.0
    %v498 = vmax.f32 %v465, 0.0
    %v499 = vmax.f32 %v467, 0.0
    %v500 = vmax.f32 %v470, 0.0
    %v501 = vmax.f32 %v472, 0.0
    %v502 = vmax.f32 %v475, 0.0
    %v503 = vmax.f32 %v477, 0.0
    %v504 = vmax.f32 %v480, 0.0
    %v505 = vmax.f32 %v482, 0.0
    %v506 = vmax.f32 %v485, 0.0
    %v507 = vmax.f32 %v487, 0.0
    %v508 = vmax.f32 %v490, 0.0
    %v509 = vmax.f32 %v492, 0.0
    %v510 = vld [vmem:[%s5] sm:$0xf]
    %v511 = vpack.c.bf16 %v495, %v494
    %v512 = vpack.c.bf16 %v497, %v496
    %v513 = vpack.c.bf16 %v499, %v498
    %v514 = vpack.c.bf16 %v501, %v500
    %v515 = vpack.c.bf16 %v503, %v502
    %v516 = vpack.c.bf16 %v505, %v504
    %v517 = vpack.c.bf16 %v507, %v506
    %v518 = vpack.c.bf16 %v509, %v508
    %519 = vmatpush.bf16.msra.mxu0 %v518
    %520 = vmatpush.bf16.msra.mxu0 %v517
    %521 = vmatpush.bf16.msra.mxu0 %v516
    %522 = vmatpush.bf16.msra.mxu0 %v515
    %523 = vmatpush.bf16.msra.mxu0 %v514
    %524 = vmatpush.bf16.msra.mxu0 %v513
    %525 = vmatpush.bf16.msra.mxu0 %v512
    %526 = vmatpush.bf16.msra.mxu0 %v511
    %527 = vmatmul.bf16.gmra.mxu0 %v510
    %v528 = vpop.f32.mrf.mxu0
    %v529 = vadd.f32 0.0, %v528
    %v530 = vpop.f32.mrf.mxu0
    %531 = vdwg.mxu0
    %s532 = sld [smem:[#allocation2]]
    %v533 = vstv %s532
    %v534 = vadd.f32 %v529, %v533
    %v535 = vsub.f32 0.0, %v534
    %v536 = vmul.f32 %v535, 1.442695
    %v537 = vpow.pop %v536
    %v538 = vadd.f32 %v537, 1.0
    %v539 = vrcp.pop %v538
    %v540 = vmul.f32 %v538, %v539
    %v541 = vsub.f32 1.0, %v540
    %v542 = vmul.f32 %v539, %v541
    %v543 = vadd.f32 %v539, %v542
    %vm544 = vweird.f32 %v538
    %vm545 = vweird.f32 %v539
    %vm546 = vmor %vm544, %vm545
    %v547 = vsel %vm546, %v539, %v543
    %v548 = vand.u32 2147483647, %v538
    %vm549 = vcmp.eq.f32.partialorder %v548, 8.507059e+37
    %v550 = vand.u32 %v538, 2147483648
    %v551 = vor.u32 1.1754944e-38, %v550
    %v552 = vsel %vm549, %v551, %v547
    %v553 = vmul.f32 1.0, %v552
    %v554 = vsub.f32 1.0, %v553
    %555 = vst [vmem:[#allocation3] sm:$0x1] %v554
    %556 = vst [vmem:[#allocation3 + $0x1] sm:$0x1] %v553
    // Predicated region
    $region30: #{tpu_custom_call.1} parent=1 // pred_check
      _
    $region31: #{tpu_custom_call.1} parent=1 // pred_check_branch
      %558 = sbr.rel (0) target = $region33
    $region32: #{tpu_custom_call.1} parent=1 // pred_region
      %560 = vsyncadd [#allocation4], 0
      %s562 = sshll.u32 [#allocation3], 4
      %s563 = int_to_ptr.vmem [resolvable:$true] %s562
      %s564 = sshll.u32 %s7, 4
      %s565 = int_to_ptr.hbm [resolvable:$true] %s564
      %567 = dma.vmem_to_hbm [thread:$0]  %s563, 32, %s565, [#allocation4]
    $region33: #{tpu_custom_call.1} parent=1 // pred_fallthru
      _
    // Predicated region
    $region34: #{tpu_custom_call.1} parent=1 // pred_check
      _
    $region35: #{tpu_custom_call.1} parent=1 // pred_check_branch
      %569 = sbr.rel (0) target = $region37
    $region36: #{tpu_custom_call.1} parent=1 // pred_region
      %571 = dma.done [#allocation4], 32
    $region37: #{tpu_custom_call.1} parent=1 // pred_fallthru
      _
    %572 = vsyncpa [#allocation4], 1

</llo_original>
